<compile_context>
chip_gen: v7x
topology: tpu7x:2x2x1
jax: 0.10.0
libtpu: 0.0.40
codegen_flags: <defaults>
</compile_context>

<pallas_src>
import functools
import math

import jax
import jax.numpy as jnp
from jax.experimental import pallas as pl
from jax.experimental.pallas import tpu as pltpu


def _phi3_su_rope_kernel(pos_ref, inv_freq_ref, cs_ref, *, half, scaling_factor):
    # pos_ref: (1, tS, 1) int32 -- positions already laid out along sublanes,
    # so no lane<->sublane transpose is needed to form the outer product.
    pos = pos_ref[0].astype(jnp.float32)          # (tS, 1)
    inv_freq = inv_freq_ref[...]                  # (1, half) f32, precomputed

    freqs = pos * inv_freq                        # (tS, half) f32

    c = jnp.cos(freqs)                            # EUP work on half-dim only
    s = jnp.sin(freqs)
    if scaling_factor != 1.0:                     # static python branch
        c = c * scaling_factor
        s = s * scaling_factor
    c = c.astype(cs_ref.dtype)
    s = s.astype(cs_ref.dtype)

    # Fused lane-dense output tile: [cos | cos | sin | sin] along the lane axis
    # (2*dim total).  The HBM writeback of the (1, tS, 2*dim) tile is unmasked.
    cs_ref[0, :, 0 * half:1 * half] = c
    cs_ref[0, :, 1 * half:2 * half] = c
    cs_ref[0, :, 2 * half:3 * half] = s
    cs_ref[0, :, 3 * half:4 * half] = s


def _pick_seq_tile(S, target=512):
    """Largest convenient sequence tile that divides S (full S if small)."""
    if S <= target:
        return S
    for t in (target, 256, 128):
        if S % t == 0:
            return t
    return S  # fallback: whole sequence per batch row


def phi3_su_scaled_rotary_embedding(x, position_ids, *, dim,
                                    max_position_embeddings,
                                    original_max_position_embeddings,
                                    base, short_factor, long_factor,
                                    seq_tile=512):
    """Returns (cos, sin) with shape (B, S, dim) and dtype x.dtype."""
    B, S = position_ids.shape
    half = dim // 2
    out_dtype = x.dtype

    # Static host-side scalar math (matches the torch module).
    scale = max_position_embeddings / original_max_position_embeddings
    if scale <= 1.0:
        scaling_factor = 1.0
    else:
        scaling_factor = math.sqrt(
            1.0 + math.log(scale) / math.log(original_max_position_embeddings))

    # --- Hoisted data-dependent setup (tiny plain-JAX work) -----------------
    # seq_len / short-vs-long select / inv_freq must be computed globally,
    # BEFORE tiling, otherwise a per-tile max would select the wrong factors.
    pos32 = position_ids.astype(jnp.int32)
    seq_len = jnp.max(pos32) + 1
    base_pow = jnp.float32(base) ** (jnp.arange(0, dim, 2, dtype=jnp.float32) / dim)
    sf = jnp.asarray(short_factor, jnp.float32)
    lf = jnp.asarray(long_factor, jnp.float32)
    ext = jnp.where(seq_len > original_max_position_embeddings, lf, sf)
    inv_freq = (1.0 / (ext * base_pow)).reshape(1, half)          # (1, half) f32

    # Positions as a column so they land on the sublane axis inside the kernel.
    pos_col = pos32.reshape(B, S, 1)

    tS = _pick_seq_tile(S, seq_tile)
    grid = (B, S // tS)

    kernel = functools.partial(_phi3_su_rope_kernel,
                               half=half,
                               scaling_factor=float(scaling_factor))

    itemsize = jnp.dtype(out_dtype).itemsize
    cost = pl.CostEstimate(
        flops=int(2 * B * S * half),                 # pos*inv_freq + scale mul
        transcendentals=int(B * S * dim),            # cos + sin over (B,S,half)
        bytes_accessed=int(B * S * 2 * dim * itemsize + B * S * 4),
    )

    cs = pl.pallas_call(
        kernel,
        out_shape=jax.ShapeDtypeStruct((B, S, 2 * dim), out_dtype),
        grid_spec=pltpu.PrefetchScalarGridSpec(
            num_scalar_prefetch=0,
            grid=grid,
            in_specs=[
                pl.BlockSpec((1, tS, 1), lambda b, s: (b, s, 0)),       # positions
                pl.BlockSpec((1, half), lambda b, s: (0, 0)),           # inv_freq
            ],
            out_specs=pl.BlockSpec((1, tS, 2 * dim), lambda b, s: (b, s, 0)),
        ),
        compiler_params=pltpu.CompilerParams(
            dimension_semantics=("parallel", "parallel"),
        ),
        cost_estimate=cost,
    )(pos_col, inv_freq)

    # Split the fused slab back into (cos, sin).  A fused attention consumer
    # would read the slab directly instead of materializing the slices.
    cos = cs[..., :dim]
    sin = cs[..., dim:]
    return cos, sin


def _reference(x, position_ids, *, dim, max_position_embeddings,
               original_max_position_embeddings, base,
               short_factor, long_factor):
    """Pure-JAX reference mirroring the torch forward."""
    seq_len = jnp.max(position_ids) + 1
    sf = jnp.asarray(short_factor, jnp.float32)
    lf = jnp.asarray(long_factor, jnp.float32)
    ext = jnp.where(seq_len > original_max_position_embeddings, lf, sf)
    inv_freq_shape = jnp.arange(0, dim, 2, dtype=jnp.float32) / dim
    inv_freq = 1.0 / (ext * jnp.float32(base) ** inv_freq_shape)
    freqs = position_ids.astype(jnp.float32)[:, :, None] * inv_freq[None, None, :]
    emb = jnp.concatenate([freqs, freqs], axis=-1)
    scale = max_position_embeddings / original_max_position_embeddings
    if scale <= 1.0:
        scaling_factor = 1.0
    else:
        scaling_factor = math.sqrt(
            1.0 + math.log(scale) / math.log(original_max_position_embeddings))
    return (jnp.cos(emb) * scaling_factor).astype(x.dtype), \
           (jnp.sin(emb) * scaling_factor).astype(x.dtype)


if __name__ == "__main__":
    key = jax.random.PRNGKey(0)
    k_x, k_sf, k_lf = jax.random.split(key, 3)

    # Small, module-consistent shapes.
    B, S, H = 2, 8, 32          # batch, sequence, hidden (x only supplies dtype)
    dim = 64                    # rotary dim
    half = dim // 2
    max_position_embeddings = 8192
    original_max_position_embeddings = 4096
    base = 10000.0

    # Deterministic synthetic rope_scaling factors (shape dim//2 each).
    short_factor = 1.0 + 0.1 * jax.random.uniform(k_sf, (half,), jnp.float32)
    long_factor = 1.0 + 2.0 * jax.random.uniform(k_lf, (half,), jnp.float32)

    x = jax.random.normal(k_x, (B, S, H), dtype=jnp.float32)
    position_ids = jnp.broadcast_to(jnp.arange(S, dtype=jnp.int32)[None, :], (B, S))

    cfg = dict(dim=dim,
               max_position_embeddings=max_position_embeddings,
               original_max_position_embeddings=original_max_position_embeddings,
               base=base,
               short_factor=short_factor,
               long_factor=long_factor)

    cos, sin = phi3_su_scaled_rotary_embedding(x, position_ids, **cfg)
    cos = jax.block_until_ready(cos)
    sin = jax.block_until_ready(sin)

    cos_ref, sin_ref = _reference(x, position_ids, **cfg)
    assert cos.shape == (B, S, dim) and sin.shape == (B, S, dim)
    assert jnp.allclose(cos, cos_ref, atol=1e-5, rtol=1e-5)
    assert jnp.allclose(sin, sin_ref, atol=1e-5, rtol=1e-5)

    print("KERNEL_OK")
</pallas_src>

<mosaic_0001>
module attributes {stable_mosaic.version = 11 : i64} {
  func.func @_phi3_su_rope_kernel(%arg0: i32, %arg1: i32, %arg2: memref<1x8x1xi32, #tpu.memory_space<vmem>>, %arg3: memref<1x32xf32, #tpu.memory_space<vmem>>, %arg4: memref<1x8x128xf32, #tpu.memory_space<vmem>>) attributes {dimension_semantics = [#tpu.dimension_semantics<parallel>, #tpu.dimension_semantics<parallel>], iteration_bounds = array<i64: 2, 1>, scalar_prefetch = 0 : i64, scratch_operands = 0 : i64, tpu.core_type = #tpu.core_type<tc>, window_params = [{transform_indices = @transform_0, window_bounds = array<i64: 1, 8, 1>}, {pipeline_mode = #tpu.pipeline_mode<synchronous>, transform_indices = @transform_1, window_bounds = array<i64: 1, 32>}, {transform_indices = @transform_2, window_bounds = array<i64: 1, 8, 128>}]} {
    %c0 = arith.constant 0 : index
    %c0_0 = arith.constant 0 : index
    %c0_1 = arith.constant 0 : index
    %0 = vector.load %arg2[%c0, %c0_0, %c0_1] : memref<1x8x1xi32, #tpu.memory_space<vmem>>, vector<1x8x1xi32>
    %1 = vector.shape_cast %0 : vector<1x8x1xi32> to vector<8x1xi32>
    %2 = arith.sitofp %1 : vector<8x1xi32> to vector<8x1xf32>
    %c0_2 = arith.constant 0 : index
    %c0_3 = arith.constant 0 : index
    %3 = vector.load %arg3[%c0_2, %c0_3] : memref<1x32xf32, #tpu.memory_space<vmem>>, vector<1x32xf32>
    %4 = vector.broadcast %2 : vector<8x1xf32> to vector<8x32xf32>
    %5 = vector.broadcast %3 : vector<1x32xf32> to vector<8x32xf32>
    %6 = arith.mulf %4, %5 : vector<8x32xf32>
    %7 = math.cos %6 : vector<8x32xf32>
    %8 = math.sin %6 : vector<8x32xf32>
    %cst = arith.constant 1.040833 : f32
    %9 = vector.broadcast %cst : f32 to vector<8x32xf32>
    %10 = arith.mulf %7, %9 : vector<8x32xf32>
    %cst_4 = arith.constant 1.040833 : f32
    %11 = vector.broadcast %cst_4 : f32 to vector<8x32xf32>
    %12 = arith.mulf %8, %11 : vector<8x32xf32>
    %c0_5 = arith.constant 0 : index
    %c0_6 = arith.constant 0 : index
    %c0_7 = arith.constant 0 : index
    %13 = vector.load %arg4[%c0_5, %c0_6, %c0_7] : memref<1x8x128xf32, #tpu.memory_space<vmem>>, vector<1x8x32xf32>
    %14 = vector.shape_cast %13 : vector<1x8x32xf32> to vector<8x32xf32>
    %15 = vector.shape_cast %10 : vector<8x32xf32> to vector<1x8x32xf32>
    tpu.vector_store %arg4[%c0_5, %c0_6, %c0_7], %15 {strides = array<i32>} : memref<1x8x128xf32, #tpu.memory_space<vmem>>, vector<1x8x32xf32>,
    %c0_8 = arith.constant 0 : index
    %c0_9 = arith.constant 0 : index
    %c32 = arith.constant 32 : index
    %16 = vector.load %arg4[%c0_8, %c0_9, %c32] : memref<1x8x128xf32, #tpu.memory_space<vmem>>, vector<1x8x32xf32>
    %17 = vector.shape_cast %16 : vector<1x8x32xf32> to vector<8x32xf32>
    %18 = vector.shape_cast %10 : vector<8x32xf32> to vector<1x8x32xf32>
    tpu.vector_store %arg4[%c0_8, %c0_9, %c32], %18 {strides = array<i32>} : memref<1x8x128xf32, #tpu.memory_space<vmem>>, vector<1x8x32xf32>,
    %c0_10 = arith.constant 0 : index
    %c0_11 = arith.constant 0 : index
    %c64 = arith.constant 64 : index
    %19 = vector.load %arg4[%c0_10, %c0_11, %c64] : memref<1x8x128xf32, #tpu.memory_space<vmem>>, vector<1x8x32xf32>
    %20 = vector.shape_cast %19 : vector<1x8x32xf32> to vector<8x32xf32>
    %21 = vector.shape_cast %12 : vector<8x32xf32> to vector<1x8x32xf32>
    tpu.vector_store %arg4[%c0_10, %c0_11, %c64], %21 {strides = array<i32>} : memref<1x8x128xf32, #tpu.memory_space<vmem>>, vector<1x8x32xf32>,
    %c0_12 = arith.constant 0 : index
    %c0_13 = arith.constant 0 : index
    %c96 = arith.constant 96 : index
    %22 = vector.load %arg4[%c0_12, %c0_13, %c96] : memref<1x8x128xf32, #tpu.memory_space<vmem>>, vector<1x8x32xf32>
    %23 = vector.shape_cast %22 : vector<1x8x32xf32> to vector<8x32xf32>
    %24 = vector.shape_cast %12 : vector<8x32xf32> to vector<1x8x32xf32>
    tpu.vector_store %arg4[%c0_12, %c0_13, %c96], %24 {strides = array<i32>} : memref<1x8x128xf32, #tpu.memory_space<vmem>>, vector<1x8x32xf32>,
    return
  }
  func.func @transform_0(%arg0: i32, %arg1: i32) -> (i32, i32, i32) {
    %c0_i32 = arith.constant 0 : i32
    %c0_i32_0 = arith.constant 0 : i32
    return %arg0, %arg1, %c0_i32 : i32, i32, i32
  }
  func.func @transform_1(%arg0: i32, %arg1: i32) -> (i32, i32) {
    %c0_i32 = arith.constant 0 : i32
    %c0_i32_0 = arith.constant 0 : i32
    %c0_i32_1 = arith.constant 0 : i32
    return %c0_i32, %c0_i32_0 : i32, i32
  }
  func.func @transform_2(%arg0: i32, %arg1: i32) -> (i32, i32, i32) {
    %c0_i32 = arith.constant 0 : i32
    %c0_i32_0 = arith.constant 0 : i32
    return %arg0, %arg1, %c0_i32 : i32, i32, i32
  }
}

</mosaic_0001>

<llo_original>
// kernel: tpu_custom_call.1
$region0: #{tpu_custom_call.1}
  #allocation0 [shape = 'u32[]', space=smem, size = 0x4, offset = 0x4, fixed_abs, tag = 'smem constant byte address 0x4 - core index']
  #allocation1 [shape = 'u32[144,128]{1,0:T(1,128)}', space=vmem, size = 0x12000, scoped, tag = 'internal scratch']
  %s0 = inlined_call_operand.vmem [shape: s32[2,8,1], index: 0, kind: input, shape index: {}]
  %s1 = inlined_call_operand.vmem [shape: f32[1,32], index: 1, kind: input, shape index: {}]
  %s2 = inlined_call_operand.hbm [shape: f32[2,8,128], index: 2, kind: output, shape index: {}]
  %s3 = sld [smem:[#allocation0]]
  $region41: #{tpu_custom_call.1} parent=0
    _
  %s5 = ssub.s32 1, %s3
  %s6 = scalar_select 0, %s5, %s3
  $region1: #{tpu_custom_call.1} parent=0
    #allocation2 [shape = 'u8[8192]{0}', space=vmem, size = 0x2000, scoped, tag = 'output window, operand 0']
    #allocation3 [shape = 's32[2]{0}', space=sflag, size = 0x8, scoped, tag = 'scoped memory for tpu_custom_call.1']
    %7 = vsyncpa [#allocation3], 0
    %s8 = scalar_lea.sflag [#allocation3], 1
    %9 = vsyncpa %s8, 0
    loop: start=0, step=1, limit=4
    $region2: #{tpu_custom_call.1} parent=1 // loop_pre_header
      _
    $region3: #{tpu_custom_call.1} parent=1 // loop_header
      %s11 = sphi 0, %s15
      %p12 = scmp.ge.s32.totalorder %s11, 4
      %s18 = sphi 0, %s30
      %s19 = sphi 0, %s26
      %s20 = sphi 0, %s18
      %s21 = sphi 0, %s19
      %s22 = sphi 0, %s20
      %s23 = sphi 0, %s21
      %s35 = sphi 0, %s37
      %s38 = sphi 0, %s35
      %s39 = sphi 0, %s38
      %s55 = sphi 0, %s39
      %s59 = sphi 0, %s59
      %s61 = sphi 0, %s59
      %s62 = sphi 0, %s61
      %s76 = sphi 0, %s62
      %s84 = sphi 0, %s86
      %s87 = sphi 0, %s84
      %s88 = sphi 0, %s87
      %s104 = sphi 0, %s88
    $region4: #{tpu_custom_call.1} parent=1 // loop_header_branch
      %14 = sbr.rel (%p12) target = $region8
    $region5: #{tpu_custom_call.1} parent=1 // loop_body
      %s16 = ssub.s32 %s11, 1
      %s17 = ssub.s32 %s11, 2
      %s24 = sadd.s32 1, %s19
      %p25 = scmp.ge.s32.totalorder %s24, 1
      %s26 = scalar_select %p25, 0, %s24
      %s27 = sadd.s32 1, %s18
      %s28 = scalar_select %p25, %s27, %s18
      %p29 = scmp.ge.s32.totalorder %s28, 2
      %s30 = scalar_select %p29, 0, %s28
      %s31 = ssub.s32 %s18, %s30
      %s32 = ssub.s32 %s19, %s26
      %s33 = sor.u32 %s31, %s32
      %p34 = scmp.eq.s32.totalorder %s33, 0
      %s36 = sadd.s32 %s35, 1
      %s37 = scalar_select %p34, %s35, %s36
      %p40 = pneg %p34
      %p41 = scmp.eq.s32.totalorder %s11, 1
      %p42 = por %p40, %p41
      %p43 = scmp.ne.s32.totalorder %s35, %s38
      %p44 = scmp.eq.s32.totalorder %s11, 0
      %p45 = por %p43, %p44
      %p46 = scmp.ne.s32.totalorder %s35, %s38
      %p47 = scmp.eq.s32.totalorder %s16, 1
      %p48 = por %p46, %p47
      %p49 = scmp.ne.s32.totalorder %s38, %s39
      %p50 = scmp.eq.s32.totalorder %s16, 0
      %p51 = por %p49, %p50
      %p52 = scmp.ne.s32.totalorder %s38, %s39
      %p53 = scmp.eq.s32.totalorder %s17, 1
      %p54 = por %p52, %p53
      %p56 = scmp.ne.s32.totalorder %s39, %s55
      %p57 = scmp.eq.s32.totalorder %s17, 0
      %p58 = por %p56, %p57
      %s60 = sadd.s32 %s59, 1
      %p63 = scmp.eq.s32.totalorder %s11, 1
      %p64 = scmp.ne.s32.totalorder %s59, %s61
      %p65 = scmp.eq.s32.totalorder %s11, 0
      %p66 = por %p64, %p65
      %p67 = scmp.ne.s32.totalorder %s59, %s61
      %p68 = scmp.eq.s32.totalorder %s16, 1
      %p69 = por %p67, %p68
      %p70 = scmp.ne.s32.totalorder %s61, %s62
      %p71 = scmp.eq.s32.totalorder %s16, 0
      %p72 = por %p70, %p71
      %p73 = scmp.ne.s32.totalorder %s61, %s62
      %p74 = scmp.eq.s32.totalorder %s17, 1
      %p75 = por %p73, %p74
      %p77 = scmp.ne.s32.totalorder %s62, %s76
      %p78 = scmp.eq.s32.totalorder %s17, 0
      %p79 = por %p77, %p78
      %s80 = ssub.s32 %s18, %s30
      %s81 = ssub.s32 %s19, %s26
      %s82 = sor.u32 %s80, %s81
      %p83 = scmp.eq.s32.totalorder %s82, 0
      %s85 = sadd.s32 %s84, 1
      %s86 = scalar_select %p83, %s84, %s85
      %p89 = pneg %p83
      %p90 = scmp.eq.s32.totalorder %s11, 1
      %p91 = por %p89, %p90
      %p92 = scmp.ne.s32.totalorder %s84, %s87
      %p93 = scmp.eq.s32.totalorder %s11, 0
      %p94 = por %p92, %p93
      %p95 = scmp.ne.s32.totalorder %s84, %s87
      %p96 = scmp.eq.s32.totalorder %s16, 1
      %p97 = por %p95, %p96
      %p98 = scmp.ne.s32.totalorder %s87, %s88
      %p99 = scmp.eq.s32.totalorder %s16, 0
      %p100 = por %p98, %p99
      %p101 = scmp.ne.s32.totalorder %s87, %s88
      %p102 = scmp.eq.s32.totalorder %s17, 1
      %p103 = por %p101, %p102
      %p105 = scmp.ne.s32.totalorder %s88, %s104
      %p106 = scmp.eq.s32.totalorder %s17, 0
      %p107 = por %p105, %p106
      %p108 = scmp.le.s32.totalorder 1, %s11
      %p109 = scmp.lt.s32.totalorder %s11, 3
      %p110 = pnand %p108, %p109
      %p111 = pneg %p110
      // Predicated region
      $region9: #{tpu_custom_call.1} parent=5 // pred_check
        _
      $region10: #{tpu_custom_call.1} parent=5 // pred_check_branch
        %113 = sbr.rel (%p110) target = $region12
      $region11: #{tpu_custom_call.1} parent=5 // pred_region
        %s114 = ssub.s32 %s11, 1
        // Predicated region
        $region13: #{tpu_custom_call.1} parent=11 // pred_check
          %p115 = pneg %p72
        $region14: #{tpu_custom_call.1} parent=11 // pred_check_branch
          %117 = sbr.rel (%p115) target = $region16
        $region15: #{tpu_custom_call.1} parent=11 // pred_region
          _
        $region16: #{tpu_custom_call.1} parent=11 // pred_fallthru
          _
      $region12: #{tpu_custom_call.1} parent=5 // pred_fallthru
        _
      %p118 = scmp.lt.s32.totalorder %s11, 2
      // Predicated region
      $region17: #{tpu_custom_call.1} parent=5 // pred_check
        %p119 = pneg %p118
      $region18: #{tpu_custom_call.1} parent=5 // pred_check_branch
        %121 = sbr.rel (%p119) target = $region20
      $region19: #{tpu_custom_call.1} parent=5 // pred_region
        // Predicated region
        $region21: #{tpu_custom_call.1} parent=19 // pred_check
          %p122 = pneg %p45
        $region22: #{tpu_custom_call.1} parent=19 // pred_check_branch
          %124 = sbr.rel (%p122) target = $region24
        $region23: #{tpu_custom_call.1} parent=19 // pred_region
          %p125 = scmp.lt.s32.totalorder %s18, 1
          %s126 = scalar_select %p125, %s18, 1
          %p127 = scmp.lt.s32.totalorder %s19, 0
          %s128 = scalar_select %p127, %s19, 0
          %s129 = sadd.s32 %s128, %s126
          %s130 = smul.addr %s129, 8
          %s131 = scalar_lea.vmem %s0, %s130
        $region24: #{tpu_custom_call.1} parent=19 // pred_fallthru
          _
      $region20: #{tpu_custom_call.1} parent=5 // pred_fallthru
        _
      %p132 = scmp.le.s32.totalorder 1, %s11
      %p133 = scmp.lt.s32.totalorder %s11, 3
      %p134 = pnand %p132, %p133
      %p135 = pneg %p134
      // Predicated region
      $region25: #{tpu_custom_call.1} parent=5 // pred_check
        _
      $region26: #{tpu_custom_call.1} parent=5 // pred_check_branch
        %137 = sbr.rel (%p134) target = $region28
      $region27: #{tpu_custom_call.1} parent=5 // pred_region
        %s138 = ssub.s32 %s11, 1
        %p139 = scmp.lt.s32.totalorder %s20, 1
        %s140 = scalar_select %p139, %s20, 1
        %p141 = scmp.lt.s32.totalorder %s21, 0
        %s142 = scalar_select %p141, %s21, 0
        %s143 = sadd.s32 %s142, %s140
        %s144 = smul.addr %s143, 8
        %s145 = scalar_lea.vmem %s0, %s144
        %p146 = pneg %p51
        %p147 = pneg %p48
        %p148 = pneg %p72
        %p149 = pneg %p69
        %p150 = pneg %p100
        %p151 = pneg %p97
        %s152 = sand.u32 %s87, 1
        %s153 = scalar_lea.sflag [#allocation3], %s152
        %s154 = sand.u32 %s87, 1
        %s155 = smul.addr %s154, 8
        %s156 = scalar_lea.vmem [#allocation2], %s155
        %p157 = scmp.lt.s32.totalorder %s20, 1
        %s158 = scalar_select %p157, %s20, 1
        %p159 = scmp.lt.s32.totalorder %s21, 0
        %s160 = scalar_select %p159, %s21, 0
        %s161 = sadd.s32 %s160, %s158
        %s162 = smul.addr %s161, 8
        %s163 = scalar_lea.vmem %s0, %s162
        %v164 = vld [vmem:[%s163] sm:$0xff]
        %v165 = vcvt.s32.f32 %v164
        %v166 = vld [vmem:[%s1] sm:$0x1]
        %168 = vset.pattern.permute.xlu0 0
        %169 = vperm.xlu0 %168, %v165
        %v170 = vpop.permute.xlu0 %169
        %v173 = vlaneseq
        %v174 = vshrl.u32 %v173, 7
        %v175 = vsub.s32 0, %v174
        %v176 = vrot.slane %v166, %v175
        %v178 = vmul.f32 %v170, %v176
        %v179 = vand.u32 2147483647, %v178
        %vm180 = vcmp.le.f32.partialorder %v179, 0.7853982
        %vm181 = vcmp.lt.s32.totalorder %v178, 0
        %v182 = vand.u32 %v178, 2139095040
        %v183 = vshrl.u32 %v182, 23
        %v184 = vsub.s32 %v183, 127
        %v185 = vand.u32 2147483647, %v178
        %v186 = vand.u32 %v185, 8388607
        %v187 = vor.u32 %v186, 8388608
        %v188 = vsub.s32 0, %v187
        %v189 = vadd.s32 %v184, 1
        %vm190 = vcmp.gt.s32.totalorder %v189, 0
        %v191 = vsel %vm190, %v189, 0
        %v192 = vshrl.u32 %v191, 5
        %v193 = vand.u32 %v191, 31
        %v194 = vsub.s32 32, %v193
        %v195 = vshrl.u32 683565275, %v194
        %v196 = vshll.u32 683565275, %v193
        %v197 = vshrl.u32 2475754826, %v194
        %v198 = vor.u32 %v196, %v197
        %v199 = vshll.u32 2475754826, %v193
        %v200 = vshrl.u32 2131351028, %v194
        %v201 = vor.u32 %v199, %v200
        %v202 = vshll.u32 2131351028, %v193
        %v203 = vshrl.u32 2102212464, %v194
        %v204 = vor.u32 %v202, %v203
        %v205 = vshll.u32 2102212464, %v193
        %v206 = vshrl.u32 920167782, %v194
        %v207 = vor.u32 %v205, %v206
        %v208 = vshll.u32 920167782, %v193
        %v209 = vshrl.u32 1326507024, %v194
        %v210 = vor.u32 %v208, %v209
        %vm211 = vcmp.lt.s32.totalorder %v192, 1
        %vm212 = vcmp.lt.s32.totalorder %v192, 2
        %vm213 = vcmp.lt.s32.totalorder %v192, 3
        %vm214 = vcmp.lt.s32.totalorder %v192, 4
        %v215 = vsel %vm211, %v195, %v198
        %v216 = vsel %vm214, %v204, 2102212464
        %v217 = vsel %vm213, %v201, %v216
        %v218 = vsel %vm212, %v215, %v217
        %v219 = vsel %vm211, %v198, %v201
        %v220 = vsel %vm214, %v207, 920167782
        %v221 = vsel %vm213, %v204, %v220
        %v222 = vsel %vm212, %v219, %v221
        %v223 = vsel %vm211, %v201, %v204
        %v224 = vsel %vm214, %v210, 1326507024
        %v225 = vsel %vm213, %v207, %v224
        %v226 = vsel %vm212, %v223, %v225
        %v227 = vshll.u32 %v187, 8
        %v228 = vmul.u32.u64.compose %v227, %v226
        %v229 = vextract.low.u32 %v228
        %v230 = vextract.high.u32 %v228
        %v231 = vmul.u32.u64.compose %v227, %v222
        %v232 = vextract.low.u32 %v231
        %v233 = vextract.high.u32 %v231
        %v234 = vmul.u32 %v227, %v218
        %v235 = vadd.s32 %v230, %v232
        %vm236 = vc.u32 %v230, %v232
        %v237 = vadd.s32 %v233, 1
        %v238 = vsel %vm236, %v237, %v233
        %v239 = vadd.s32 %v234, %v238
        %v240 = vadd.s32 %v239, 536870912
        %v241 = vshrl.u32 %v240, 30
        %v242 = vshll.u32 %v241, 30
        %v243 = vsub.s32 %v239, %v242
        %vm244 = vcmp.lt.s32.totalorder %v243, 0
        %v245 = vsub.s32 0, %v243
        %v246 = vsel %vm244, %v245, %v243
        %v247 = vclz %v246
        %v248 = vsub.s32 %v247, 2
        %vm249 = vcmp.gt.s32.totalorder 0, %v248
        %v250 = vsel %vm249, 0, %v248
        %v251 = vsub.s32 32, %v250
        %v252 = vshll.u32 %v243, %v250
        %v253 = vshrl.u32 %v235, %v251
        %v254 = vor.u32 %v252, %v253
        %v255 = vsub.s32 4294967266, %v250
        %v256 = vadd.s32 %v255, 127
        %v257 = vshll.u32 %v256, 23
        %v258 = vor.u32 4788187, %v257
        %v259 = vand.u32 2147483647, %v258
        %v261 = vcvt.s32.f32 %v254
        %v262 = vmul.f32 %v261, %v259
        %v263 = vxor.u32 %v262, 2147483648
        %v264 = vsel %vm181, %v263, %v262
        %v265 = vsub.s32 4, %v241
        %v266 = vsel %vm181, %v265, %v241
        %v267 = vsel %vm180, %v178, %v264
        %v268 = vsel %vm180, 0, %v266
        %v269 = vcosq.f32.pop %v267
        %v270 = vsinq.f32.pop %v267
        %vm271 = vweird.f32 %v178
        %v272 = vand.u32 %v268, 3
        %vm273 = vcmp.lt.s32.totalorder %v272, 2
        %vm274 = vcmp.eq.s32.totalorder %v272, 0
        %v275 = vxor.u32 %v270, 2147483648
        %v276 = vsel %vm274, %v269, %v275
        %vm277 = vcmp.eq.s32.totalorder %v272, 2
        %v278 = vxor.u32 %v269, 2147483648
        %v279 = vsel %vm277, %v278, %v270
        %v280 = vsel %vm273, %v276, %v279
        %v281 = vsel %vm271, nan, %v280
        %v282 = vand.u32 2147483647, %v178
        %vm283 = vcmp.le.f32.partialorder %v282, 0.7853982
        %vm284 = vcmp.lt.s32.totalorder %v178, 0
        %v285 = vand.u32 %v178, 2139095040
        %v286 = vshrl.u32 %v285, 23
        %v287 = vsub.s32 %v286, 127
        %v288 = vand.u32 2147483647, %v178
        %v289 = vand.u32 %v288, 8388607
        %v290 = vor.u32 %v289, 8388608
        %v291 = vsub.s32 0, %v290
        %v292 = vadd.s32 %v287, 1
        %vm293 = vcmp.gt.s32.totalorder %v292, 0
        %v294 = vsel %vm293, %v292, 0
        %v295 = vshrl.u32 %v294, 5
        %v296 = vand.u32 %v294, 31
        %v297 = vsub.s32 32, %v296
        %v298 = vshrl.u32 683565275, %v297
        %v299 = vshll.u32 683565275, %v296
        %v300 = vshrl.u32 2475754826, %v297
        %v301 = vor.u32 %v299, %v300
        %v302 = vshll.u32 2475754826, %v296
        %v303 = vshrl.u32 2131351028, %v297
        %v304 = vor.u32 %v302, %v303
        %v305 = vshll.u32 2131351028, %v296
        %v306 = vshrl.u32 2102212464, %v297
        %v307 = vor.u32 %v305, %v306
        %v308 = vshll.u32 2102212464, %v296
        %v309 = vshrl.u32 920167782, %v297
        %v310 = vor.u32 %v308, %v309
        %v311 = vshll.u32 920167782, %v296
        %v312 = vshrl.u32 1326507024, %v297
        %v313 = vor.u32 %v311, %v312
        %vm314 = vcmp.lt.s32.totalorder %v295, 1
        %vm315 = vcmp.lt.s32.totalorder %v295, 2
        %vm316 = vcmp.lt.s32.totalorder %v295, 3
        %vm317 = vcmp.lt.s32.totalorder %v295, 4
        %v318 = vsel %vm314, %v298, %v301
        %v319 = vsel %vm317, %v307, 2102212464
        %v320 = vsel %vm316, %v304, %v319
        %v321 = vsel %vm315, %v318, %v320
        %v322 = vsel %vm314, %v301, %v304
        %v323 = vsel %vm317, %v310, 920167782
        %v324 = vsel %vm316, %v307, %v323
        %v325 = vsel %vm315, %v322, %v324
        %v326 = vsel %vm314, %v304, %v307
        %v327 = vsel %vm317, %v313, 1326507024
        %v328 = vsel %vm316, %v310, %v327
        %v329 = vsel %vm315, %v326, %v328
        %v330 = vshll.u32 %v290, 8
        %v331 = vmul.u32.u64.compose %v330, %v329
        %v332 = vextract.low.u32 %v331
        %v333 = vextract.high.u32 %v331
        %v334 = vmul.u32.u64.compose %v330, %v325
        %v335 = vextract.low.u32 %v334
        %v336 = vextract.high.u32 %v334
        %v337 = vmul.u32 %v330, %v321
        %v338 = vadd.s32 %v333, %v335
        %vm339 = vc.u32 %v333, %v335
        %v340 = vadd.s32 %v336, 1
        %v341 = vsel %vm339, %v340, %v336
        %v342 = vadd.s32 %v337, %v341
        %v343 = vadd.s32 %v342, 536870912
        %v344 = vshrl.u32 %v343, 30
        %v345 = vshll.u32 %v344, 30
        %v346 = vsub.s32 %v342, %v345
        %vm347 = vcmp.lt.s32.totalorder %v346, 0
        %v348 = vsub.s32 0, %v346
        %v349 = vsel %vm347, %v348, %v346
        %v350 = vclz %v349
        %v351 = vsub.s32 %v350, 2
        %vm352 = vcmp.gt.s32.totalorder 0, %v351
        %v353 = vsel %vm352, 0, %v351
        %v354 = vsub.s32 32, %v353
        %v355 = vshll.u32 %v346, %v353
        %v356 = vshrl.u32 %v338, %v354
        %v357 = vor.u32 %v355, %v356
        %v358 = vsub.s32 4294967266, %v353
        %v359 = vadd.s32 %v358, 127
        %v360 = vshll.u32 %v359, 23
        %v361 = vor.u32 4788187, %v360
        %v362 = vand.u32 2147483647, %v361
        %v364 = vcvt.s32.f32 %v357
        %v365 = vmul.f32 %v364, %v362
        %v366 = vxor.u32 %v365, 2147483648
        %v367 = vsel %vm284, %v366, %v365
        %v368 = vsub.s32 4, %v344
        %v369 = vsel %vm284, %v368, %v344
        %v370 = vsel %vm283, %v178, %v367
        %v371 = vsel %vm283, 0, %v369
        %v372 = vcosq.f32.pop %v370
        %v373 = vsinq.f32.pop %v370
        %vm374 = vweird.f32 %v178
        %v375 = vadd.s32 %v371, 3
        %v376 = vand.u32 %v375, 3
        %vm377 = vcmp.lt.s32.totalorder %v376, 2
        %vm378 = vcmp.eq.s32.totalorder %v376, 0
        %v379 = vxor.u32 %v373, 2147483648
        %v380 = vsel %vm378, %v372, %v379
        %vm381 = vcmp.eq.s32.totalorder %v376, 2
        %v382 = vxor.u32 %v372, 2147483648
        %v383 = vsel %vm381, %v382, %v373
        %v384 = vsel %vm377, %v380, %v383
        %v385 = vsel %vm374, nan, %v384
        %v386 = vmul.f32 %v281, 1.040833
        %v387 = vmul.f32 %v385, 1.040833
        %vm388 = vcmask 261120
        %389 = vst.msk [vmem:[%s156] sm:$0xff] %vm388, %v386
        %391 = vrot.lane.b32.xlu0 %v386, 32
        %v392 = vpop.permute.xlu0 %391
        %vm394 = vcmask 523520
        %395 = vst.msk [vmem:[%s156] sm:$0xff] %vm394, %v392
        %397 = vrot.lane.b32.xlu0 %v387, 64
        %v398 = vpop.permute.xlu0 %397
        %vm400 = vcmask 785920
        %401 = vst.msk [vmem:[%s156] sm:$0xff] %vm400, %v398
        %402 = vrot.lane.b32.xlu0 %v387, 96
        %v403 = vpop.permute.xlu0 %402
        %vm405 = vcmask 1048320
        %406 = vst.msk [vmem:[%s156] sm:$0xff] %vm405, %v403
        %s407 = sand.u32 %s87, 1
        %s408 = scalar_lea.sflag [#allocation3], %s407
        %s409 = sand.u32 %s87, 1
        %s410 = smul.addr %s409, 8
        %s411 = scalar_lea.vmem [#allocation2], %s410
        // Predicated region
        $region29: #{tpu_custom_call.1} parent=27 // pred_check
          %p412 = pneg %p97
        $region30: #{tpu_custom_call.1} parent=27 // pred_check_branch
          %414 = sbr.rel (%p412) target = $region32
        $region31: #{tpu_custom_call.1} parent=27 // pred_region
          %s416 = ssub.s32 128, 128
          %417 = vsyncadd %s408, %s416
          %s418 = sadd.s32 %s21, %s20
          %s419 = smul.addr %s418, 128
          %s420 = scalar_lea.hbm %s2, %s419
          %s422 = sshll.u32 %s411, 4
          %s423 = int_to_ptr.vmem [resolvable:$true] %s422
          %425 = dma.vmem_to_hbm [thread:$0]  %s423, 128, %s420, %s408
        $region32: #{tpu_custom_call.1} parent=27 // pred_fallthru
          _
      $region28: #{tpu_custom_call.1} parent=5 // pred_fallthru
        _
      %p426 = scmp.le.s32.totalorder 2, %s11
      // Predicated region
      $region33: #{tpu_custom_call.1} parent=5 // pred_check
        %p427 = pneg %p426
      $region34: #{tpu_custom_call.1} parent=5 // pred_check_branch
        %429 = sbr.rel (%p427) target = $region36
      $region35: #{tpu_custom_call.1} parent=5 // pred_region
        %s430 = ssub.s32 %s11, 2
        // Predicated region
        $region37: #{tpu_custom_call.1} parent=35 // pred_check
          %p431 = pneg %p103
        $region38: #{tpu_custom_call.1} parent=35 // pred_check_branch
          %433 = sbr.rel (%p431) target = $region40
        $region39: #{tpu_custom_call.1} parent=35 // pred_region
          %s434 = sand.u32 %s88, 1
          %s435 = scalar_lea.sflag [#allocation3], %s434
          %s436 = sand.u32 %s88, 1
          %s437 = smul.addr %s436, 8
          %s438 = scalar_lea.vmem [#allocation2], %s437
          %439 = dma.done %s435, 128
        $region40: #{tpu_custom_call.1} parent=35 // pred_fallthru
          _
      $region36: #{tpu_custom_call.1} parent=5 // pred_fallthru
        _
    $region6: #{tpu_custom_call.1} parent=1 // loop_footer
      %s15 = sadd.s32 1, %s11
    $region7: #{tpu_custom_call.1} parent=1 // loop_footer_branch
      %10 = sbr.rel target = $region3
    $region8: #{tpu_custom_call.1} parent=1 // loop_exit
      _
    %440 = vsyncpa [#allocation3], 1
    %s441 = scalar_lea.sflag [#allocation3], 1
    %442 = vsyncpa %s441, 1

</llo_original>
